<compile_context>
chip_gen: v7x
topology: tpu7x:2x2x1
jax: 0.10.0
libtpu: 0.0.40
codegen_flags: <defaults>
</compile_context>

<pallas_src>
import functools

import numpy as np
import jax
import jax.numpy as jnp
from jax import lax
from jax.experimental import pallas as pl
from jax.experimental.pallas import tpu as pltpu

EPS = 1e-5  # nn.LayerNorm default eps


# ----------------------------------------------------------------------------
# Kernel
# ----------------------------------------------------------------------------
def _sublayer_kernel(*refs, tn, use_mask, drop_threshold, lane_hint):
    if use_mask:
        x_ref, gamma_ref, beta_ref, w_ref, b_ref, bits_ref, o_ref, y_ref = refs
    else:
        x_ref, gamma_ref, beta_ref, w_ref, b_ref, o_ref, y_ref = refs
        bits_ref = None

    j = pl.program_id(1)

    # --- LayerNorm (+affine, + bf16 cast) once per row tile, cached across j --
    @pl.when(j == 0)
    def _():
        x = x_ref[...].astype(jnp.float32)                   # (tm, D)
        mean = jnp.mean(x, axis=-1, keepdims=True)
        var = jnp.mean((x - mean) ** 2, axis=-1, keepdims=True)
        xn = (x - mean) * lax.rsqrt(var + EPS)
        y_ref[...] = (xn * gamma_ref[...] + beta_ref[...]).astype(y_ref.dtype)

    # --- sublayer(y): Linear(D, D) column tile on the MXU ---------------------
    # bf16 operands (cached y, pre-cast W), f32 accumulation.
    z = jnp.dot(y_ref[...], w_ref[...], preferred_element_type=jnp.float32)
    z = z + b_ref[...]                                        # bias already f32

    # --- dropout(z): 1/keep_prob already folded into W and b in the wrapper ---
    if use_mask:
        keep = bits_ref[...] < np.uint32(drop_threshold)
        z = jnp.where(keep, z, 0.0)

    # --- residual add against the matching column slice of x ------------------
    if tn == x_ref.shape[-1]:
        x_res = x_ref[...].astype(jnp.float32)
    else:
        col0 = pl.multiple_of(j * tn, lane_hint)
        x_res = x_ref[:, pl.ds(col0, tn)].astype(jnp.float32)
    o_ref[...] = (x_res + z).astype(o_ref.dtype)


# ----------------------------------------------------------------------------
# VMEM budget & tile-size selection
# ----------------------------------------------------------------------------
def _vmem_capacity_bytes():
    """Per-TensorCore VMEM capacity, via a device_kind table."""
    try:
        kind = jax.devices()[0].device_kind.lower()
    except Exception:
        kind = ""
    if "v7" in kind:
        return 64 * 1024 * 1024          # v7x: 64 MiB per TensorCore
    if any(t in kind for t in ("v4", "v5", "v6")):
        return 128 * 1024 * 1024         # v4 / v5e / v6e
    return 64 * 1024 * 1024              # unknown backend: be conservative


def _divisors_desc(n):
    return [d for d in range(n, 0, -1) if n % d == 0]


def _choose_tn(D, budget_bytes, w_elem_bytes):
    """Largest divisor of D whose double-buffered W column tile stays within
    ~1/3 of the VMEM budget.  Prefer 256-aligned (v6e/v7x 256x256 MXU), then
    128-aligned (lane-dense output)."""
    def fits(tn):
        return 2 * D * tn * w_elem_bytes <= budget_bytes // 3

    divs = _divisors_desc(D)
    for align in (256, 128):
        if D % align == 0:
            for tn in divs:
                if tn % align == 0 and fits(tn):
                    return tn
    for tn in divs:
        if fits(tn):
            return tn
    return divs[-1]


def _choose_tm(rows, D, tn, x_bytes, out_bytes, budget_bytes, use_mask, gen_cap):
    """Row tile that fits the budget (including f32 LN temporaries), capped per
    generation, preferring >= 2 grid steps so both v7x TensorCores get work."""
    per_row = (2 * D * x_bytes                    # x tile (double-buffered)
               + 2 * tn * out_bytes               # out tile (double-buffered)
               + (2 * tn * 4 if use_mask else 0)  # dropout-bit tile
               + 2 * D                            # bf16 LN cache scratch
               + 20 * D)                          # f32 LN temporaries
    cap = max(8, budget_bytes // per_row)
    tm = min(cap, gen_cap, max(rows, 8))
    if rows > 8 and tm >= rows:
        tm = max(8, rows // 2)                    # keep >= 2 row steps
    if tm >= 256:
        tm = (tm // 256) * 256                    # fill the 256x256 MXU M dim
    else:
        tm = max(8, (tm // 8) * 8)                # sublane floor
    return tm


def _drop_threshold(keep_prob):
    return min(int(max(keep_prob, 0.0) * float(2 ** 32)), 2 ** 32 - 1)


# ----------------------------------------------------------------------------
# Wrapper
# ----------------------------------------------------------------------------
def sublayer_forward(x, gamma, beta, w, b, *, dropout_prob, training=False,
                     rng_key=None, dropout_bits=None,
                     mxu_dtype=jnp.bfloat16, tm=None, tn=None):
    """x: (B, S, D); gamma/beta: (D,); w: (D, D); b: (D,).
    dropout_bits: optional uint32 array shaped like x (one draw per element)."""
    B, S, D = x.shape
    rows = B * S

    keep_prob = float(1.0 - float(dropout_prob))
    use_mask = bool(training) and keep_prob < 1.0

    x_bytes = x.dtype.itemsize
    out_bytes = x.dtype.itemsize
    w_elem_bytes = jnp.dtype(mxu_dtype).itemsize

    vmem_cap = _vmem_capacity_bytes()
    vmem_limit = min(int(vmem_cap * 0.8), 100 * 1024 * 1024)
    budget = int(vmem_limit * 0.85)
    gen_cap = 512 if vmem_cap <= 64 * 1024 * 1024 else 1024

    if tn is None:
        tn = _choose_tn(D, budget, w_elem_bytes)
    assert D % tn == 0, "N tile must divide D"
    if tm is None:
        tm = _choose_tm(rows, D, tn, x_bytes, out_bytes,
                        budget - 2 * D * tn * w_elem_bytes, use_mask, gen_cap)
    tm = max(8, int(tm))

    rows_pad = ((rows + tm - 1) // tm) * tm
    x2 = x.reshape(rows, D)
    if rows_pad != rows:
        x2 = jnp.pad(x2, ((0, rows_pad - rows), (0, 0)))

    # Pre-cast / pre-scale params once here (single XLA ops, amortized over rows).
    gamma2 = gamma.reshape(1, D).astype(jnp.float32)
    beta2 = beta.reshape(1, D).astype(jnp.float32)
    scale = (1.0 / keep_prob) if (use_mask and keep_prob > 0.0) else (0.0 if use_mask else 1.0)
    w_m = (w.astype(jnp.float32) * scale).astype(mxu_dtype)
    b2 = b.reshape(1, D).astype(jnp.float32) * scale

    operands = [x2, gamma2, beta2, w_m, b2]
    in_specs = [
        pl.BlockSpec((tm, D), lambda i, j: (i, 0)),    # x rows (full D for LN + residual)
        pl.BlockSpec((1, D), lambda i, j: (0, 0)),     # gamma
        pl.BlockSpec((1, D), lambda i, j: (0, 0)),     # beta
        pl.BlockSpec((D, tn), lambda i, j: (0, j)),    # W column tile (bf16, pre-scaled)
        pl.BlockSpec((1, tn), lambda i, j: (0, j)),    # bias column tile (pre-scaled)
    ]

    drop_threshold = _drop_threshold(keep_prob) if use_mask else 0
    if use_mask:
        if dropout_bits is None:
            key = rng_key if rng_key is not None else jax.random.PRNGKey(0)
            bits = jax.random.bits(key, (rows, D), dtype=jnp.uint32)
        else:
            bits = dropout_bits.reshape(rows, D).astype(jnp.uint32)
        if rows_pad != rows:
            bits = jnp.pad(bits, ((0, rows_pad - rows), (0, 0)))
        operands.append(bits)
        in_specs.append(pl.BlockSpec((tm, tn), lambda i, j: (i, j)))

    lane_hint = 256 if tn % 256 == 0 else (128 if tn % 128 == 0 else tn)

    kernel = functools.partial(
        _sublayer_kernel,
        tn=tn,
        use_mask=use_mask,
        drop_threshold=drop_threshold,
        lane_hint=lane_hint,
    )

    grid = (rows_pad // tm, D // tn)
    grid_spec = pltpu.PrefetchScalarGridSpec(
        num_scalar_prefetch=0,
        grid=grid,
        in_specs=in_specs,
        out_specs=pl.BlockSpec((tm, tn), lambda i, j: (i, j)),
        scratch_shapes=[pltpu.VMEM((tm, D), mxu_dtype)],   # LN cache, carried across j
    )

    out = pl.pallas_call(
        kernel,
        out_shape=jax.ShapeDtypeStruct((rows_pad, D), x.dtype),
        grid_spec=grid_spec,
        compiler_params=pltpu.CompilerParams(
            # j must be "arbitrary": the LN scratch written at j==0 is reused
            # for every j; i stays "parallel" for v7x megacore row sharding.
            dimension_semantics=("parallel", "arbitrary"),
            vmem_limit_bytes=vmem_limit),
    )(*operands)

    return out[:rows].reshape(B, S, D)


# ----------------------------------------------------------------------------
# Reference + demo
# ----------------------------------------------------------------------------
def _reference(x, gamma, beta, w, b, *, keep_prob=1.0, keep_mask=None,
               mxu_dtype=jnp.bfloat16):
    """Pure-JAX reference mirroring the kernel's bf16-operand / f32-accumulation
    matmul. keep_mask=None means eval mode (dropout = identity)."""
    xf = x.astype(jnp.float32)
    mean = jnp.mean(xf, axis=-1, keepdims=True)
    var = jnp.mean((xf - mean) ** 2, axis=-1, keepdims=True)
    y = (xf - mean) * lax.rsqrt(var + EPS) * gamma + beta
    y_m = y.astype(mxu_dtype).astype(jnp.float32)
    if keep_mask is not None:
        scale = 1.0 / keep_prob if keep_prob > 0.0 else 0.0
        w_m = (w.astype(jnp.float32) * scale).astype(mxu_dtype).astype(jnp.float32)
        z = y_m @ w_m + b.astype(jnp.float32) * scale
        z = jnp.where(keep_mask, z, 0.0)
    else:
        w_m = w.astype(mxu_dtype).astype(jnp.float32)
        z = y_m @ w_m + b
    return (xf + z).astype(x.dtype)


if __name__ == "__main__":
    B, S, D = 2, 64, 128   # lane-dense feature dim (multiple of 128)
    dropout_prob = 0.1

    key = jax.random.PRNGKey(0)
    kx, kg, kb, kw, kbb, kd = jax.random.split(key, 6)

    x = jax.random.normal(kx, (B, S, D), dtype=jnp.float32)
    gamma = 1.0 + 0.1 * jax.random.normal(kg, (D,), dtype=jnp.float32)
    beta = 0.1 * jax.random.normal(kb, (D,), dtype=jnp.float32)
    w = jax.random.normal(kw, (D, D), dtype=jnp.float32) / jnp.sqrt(D)
    b = 0.1 * jax.random.normal(kbb, (D,), dtype=jnp.float32)

    # --- eval mode: dropout is identity ---------------------------------------
    out = sublayer_forward(x, gamma, beta, w, b,
                           dropout_prob=dropout_prob, training=False)
    out = jax.block_until_ready(out)
    ref = _reference(x, gamma, beta, w, b)
    assert out.shape == (B, S, D)
    assert jnp.allclose(out, ref, atol=1e-2, rtol=1e-2), "eval-mode mismatch"

    # --- training mode: explicit dropout bits so the reference sees the same mask
    bits = jax.random.bits(kd, (B, S, D), dtype=jnp.uint32)
    out_tr = sublayer_forward(x, gamma, beta, w, b,
                              dropout_prob=dropout_prob, training=True,
                              dropout_bits=bits)
    out_tr = jax.block_until_ready(out_tr)
    keep_prob = 1.0 - dropout_prob
    keep_mask = bits < np.uint32(_drop_threshold(keep_prob))
    ref_tr = _reference(x, gamma, beta, w, b,
                        keep_prob=keep_prob, keep_mask=keep_mask)
    assert out_tr.shape == (B, S, D)
    assert bool(jnp.all(jnp.isfinite(out_tr)))
    assert jnp.allclose(out_tr, ref_tr, atol=1e-2, rtol=1e-2), "train-mode mismatch"

    print("KERNEL_OK")
</pallas_src>

<mosaic_0001>
module attributes {stable_mosaic.version = 11 : i64} {
  func.func @_sublayer_kernel(%arg0: i32, %arg1: i32, %arg2: memref<64x128xf32, #tpu.memory_space<vmem>>, %arg3: memref<1x128xf32, #tpu.memory_space<vmem>>, %arg4: memref<1x128xf32, #tpu.memory_space<vmem>>, %arg5: memref<128x128xbf16, #tpu.memory_space<vmem>>, %arg6: memref<1x128xf32, #tpu.memory_space<vmem>>, %arg7: memref<64x128xf32, #tpu.memory_space<vmem>>, %arg8: memref<64x128xbf16, #tpu.memory_space<vmem>>) attributes {dimension_semantics = [#tpu.dimension_semantics<parallel>, #tpu.dimension_semantics<arbitrary>], iteration_bounds = array<i64: 2, 1>, scalar_prefetch = 0 : i64, scratch_operands = 1 : i64, tpu.core_type = #tpu.core_type<tc>, window_params = [{transform_indices = @transform_0, window_bounds = array<i64: 64, 128>}, {pipeline_mode = #tpu.pipeline_mode<synchronous>, transform_indices = @transform_1, window_bounds = array<i64: 1, 128>}, {pipeline_mode = #tpu.pipeline_mode<synchronous>, transform_indices = @transform_2, window_bounds = array<i64: 1, 128>}, {transform_indices = @transform_3, window_bounds = array<i64: 128, 128>}, {transform_indices = @transform_4, window_bounds = array<i64: 1, 128>}, {transform_indices = @transform_5, window_bounds = array<i64: 64, 128>}]} {
    %c0_i32 = arith.constant 0 : i32
    %0 = arith.cmpi eq, %arg1, %c0_i32 : i32
    %1 = arith.extui %0 : i1 to i32
    %c0_i32_0 = arith.constant 0 : i32
    %2 = arith.cmpi ne, %1, %c0_i32_0 : i32
    scf.if %2 {
      %c0_10 = arith.constant 0 : index
      %c0_11 = arith.constant 0 : index
      %12 = vector.load %arg2[%c0_10, %c0_11] : memref<64x128xf32, #tpu.memory_space<vmem>>, vector<64x128xf32>
      %cst_12 = arith.constant dense<0.000000e+00> : vector<64xf32>
      %13 = vector.multi_reduction <add>, %12, %cst_12 [1] : vector<64x128xf32> to vector<64xf32>
      %14 = vector.shape_cast %13 : vector<64xf32> to vector<64x1xf32>
      %cst_13 = arith.constant 1.280000e+02 : f32
      %15 = vector.broadcast %cst_13 : f32 to vector<64x1xf32>
      %16 = arith.divf %14, %15 : vector<64x1xf32>
      %17 = vector.broadcast %16 : vector<64x1xf32> to vector<64x128xf32>
      %18 = arith.subf %12, %17 : vector<64x128xf32>
      %19 = arith.mulf %18, %18 : vector<64x128xf32>
      %cst_14 = arith.constant dense<0.000000e+00> : vector<64xf32>
      %20 = vector.multi_reduction <add>, %19, %cst_14 [1] : vector<64x128xf32> to vector<64xf32>
      %21 = vector.shape_cast %20 : vector<64xf32> to vector<64x1xf32>
      %cst_15 = arith.constant 1.280000e+02 : f32
      %22 = vector.broadcast %cst_15 : f32 to vector<64x1xf32>
      %23 = arith.divf %21, %22 : vector<64x1xf32>
      %24 = vector.broadcast %16 : vector<64x1xf32> to vector<64x128xf32>
      %25 = arith.subf %12, %24 : vector<64x128xf32>
      %cst_16 = arith.constant 9.99999974E-6 : f32
      %26 = vector.broadcast %cst_16 : f32 to vector<64x1xf32>
      %27 = arith.addf %23, %26 : vector<64x1xf32>
      %28 = math.rsqrt %27 : vector<64x1xf32>
      %29 = vector.broadcast %28 : vector<64x1xf32> to vector<64x128xf32>
      %30 = arith.mulf %25, %29 : vector<64x128xf32>
      %c0_17 = arith.constant 0 : index
      %c0_18 = arith.constant 0 : index
      %31 = vector.load %arg3[%c0_17, %c0_18] : memref<1x128xf32, #tpu.memory_space<vmem>>, vector<1x128xf32>
      %32 = vector.broadcast %31 : vector<1x128xf32> to vector<64x128xf32>
      %33 = arith.mulf %30, %32 : vector<64x128xf32>
      %c0_19 = arith.constant 0 : index
      %c0_20 = arith.constant 0 : index
      %34 = vector.load %arg4[%c0_19, %c0_20] : memref<1x128xf32, #tpu.memory_space<vmem>>, vector<1x128xf32>
      %35 = vector.broadcast %34 : vector<1x128xf32> to vector<64x128xf32>
      %36 = arith.addf %33, %35 : vector<64x128xf32>
      %37 = arith.truncf %36 : vector<64x128xf32> to vector<64x128xbf16>
      %c0_21 = arith.constant 0 : index
      %c0_22 = arith.constant 0 : index
      %38 = vector.load %arg8[%c0_21, %c0_22] : memref<64x128xbf16, #tpu.memory_space<vmem>>, vector<64x128xbf16>
      tpu.vector_store %arg8[%c0_21, %c0_22], %37 {strides = array<i32>} : memref<64x128xbf16, #tpu.memory_space<vmem>>, vector<64x128xbf16>,
    } else {
    }
    %c0 = arith.constant 0 : index
    %c0_1 = arith.constant 0 : index
    %3 = vector.load %arg8[%c0, %c0_1] : memref<64x128xbf16, #tpu.memory_space<vmem>>, vector<64x128xbf16>
    %c0_2 = arith.constant 0 : index
    %c0_3 = arith.constant 0 : index
    %4 = vector.load %arg5[%c0_2, %c0_3] : memref<128x128xbf16, #tpu.memory_space<vmem>>, vector<128x128xbf16>
    %cst = arith.constant dense<0.000000e+00> : vector<64x128xf32>
    %5 = tpu.matmul %3, %4, %cst {dimension_numbers = #tpu.dot_dimension_numbers<[1], [0], [0], [1], [0, 0, 1, 1], [], []>} : vector<64x128xbf16>, vector<128x128xbf16>, vector<64x128xf32> -> vector<64x128xf32>
    %c0_4 = arith.constant 0 : index
    %c0_5 = arith.constant 0 : index
    %6 = vector.load %arg6[%c0_4, %c0_5] : memref<1x128xf32, #tpu.memory_space<vmem>>, vector<1x128xf32>
    %7 = vector.broadcast %6 : vector<1x128xf32> to vector<64x128xf32>
    %8 = arith.addf %5, %7 : vector<64x128xf32>
    %c0_6 = arith.constant 0 : index
    %c0_7 = arith.constant 0 : index
    %9 = vector.load %arg2[%c0_6, %c0_7] : memref<64x128xf32, #tpu.memory_space<vmem>>, vector<64x128xf32>
    %10 = arith.addf %9, %8 : vector<64x128xf32>
    %c0_8 = arith.constant 0 : index
    %c0_9 = arith.constant 0 : index
    %11 = vector.load %arg7[%c0_8, %c0_9] : memref<64x128xf32, #tpu.memory_space<vmem>>, vector<64x128xf32>
    tpu.vector_store %arg7[%c0_8, %c0_9], %10 {strides = array<i32>} : memref<64x128xf32, #tpu.memory_space<vmem>>, vector<64x128xf32>,
    return
  }
  func.func @transform_0(%arg0: i32, %arg1: i32) -> (i32, i32) {
    %c0_i32 = arith.constant 0 : i32
    %c0_i32_0 = arith.constant 0 : i32
    return %arg0, %c0_i32 : i32, i32
  }
  func.func @transform_1(%arg0: i32, %arg1: i32) -> (i32, i32) {
    %c0_i32 = arith.constant 0 : i32
    %c0_i32_0 = arith.constant 0 : i32
    %c0_i32_1 = arith.constant 0 : i32
    return %c0_i32, %c0_i32_0 : i32, i32
  }
  func.func @transform_2(%arg0: i32, %arg1: i32) -> (i32, i32) {
    %c0_i32 = arith.constant 0 : i32
    %c0_i32_0 = arith.constant 0 : i32
    %c0_i32_1 = arith.constant 0 : i32
    return %c0_i32, %c0_i32_0 : i32, i32
  }
  func.func @transform_3(%arg0: i32, %arg1: i32) -> (i32, i32) {
    %c0_i32 = arith.constant 0 : i32
    %c0_i32_0 = arith.constant 0 : i32
    return %c0_i32, %arg1 : i32, i32
  }
  func.func @transform_4(%arg0: i32, %arg1: i32) -> (i32, i32) {
    %c0_i32 = arith.constant 0 : i32
    %c0_i32_0 = arith.constant 0 : i32
    return %c0_i32, %arg1 : i32, i32
  }
  func.func @transform_5(%arg0: i32, %arg1: i32) -> (i32, i32) {
    %c0_i32 = arith.constant 0 : i32
    return %arg0, %arg1 : i32, i32
  }
}

</mosaic_0001>

<llo_original>
// kernel: tpu_custom_call.1
$region0: #{tpu_custom_call.1}
  #allocation0 [shape = 'u32[]', space=smem, size = 0x4, offset = 0x4, fixed_abs, tag = 'smem constant byte address 0x4 - core index']
  #allocation1 [shape = 'u32[144,128]{1,0:T(1,128)}', space=vmem, size = 0x12000, scoped, tag = 'internal scratch']
  #allocation2 [shape = 'bf16[64,128]{1,0:T(16,128)(2,1)}', space=vmem, size = 0x4000, scoped, tag = 'scratch operand']
  %s0 = inlined_call_operand.hbm [shape: f32[128,128], index: 0, kind: input, shape index: {}]
  %s1 = inlined_call_operand.vmem [shape: f32[1,128], index: 1, kind: input, shape index: {}]
  %s2 = inlined_call_operand.vmem [shape: f32[1,128], index: 2, kind: input, shape index: {}]
  %s3 = inlined_call_operand.hbm [shape: bf16[128,128], index: 3, kind: input, shape index: {}]
  %s4 = inlined_call_operand.vmem [shape: f32[1,128], index: 4, kind: input, shape index: {}]
  %s5 = inlined_call_operand.hbm [shape: f32[128,128], index: 5, kind: output, shape index: {}]
  %s6 = sld [smem:[#allocation0]]
  $region65: #{tpu_custom_call.1} parent=0
    _
  %s8 = ssub.s32 1, %s6
  %s9 = scalar_select 0, %s8, %s6
  $region1: #{tpu_custom_call.1} parent=0
    #allocation3 [shape = 'u8[65536]{0}', space=vmem, size = 0x10000, scoped, tag = 'input window, operand 0']
    #allocation4 [shape = 's32[2]{0}', space=sflag, size = 0x8, scoped, tag = 'scoped memory for tpu_custom_call.1']
    #allocation5 [shape = 's32[2]{0}', space=sflag, size = 0x8, scoped, tag = 'scoped memory for tpu_custom_call.1']
    #allocation6 [shape = 'u8[32768]{0}', space=vmem, size = 0x8000, scoped, tag = 'input window, operand 3, single buffered']
    #allocation7 [shape = 's32[1]{0}', space=sflag, size = 0x4, scoped, tag = 'scoped memory for tpu_custom_call.1']
    #allocation8 [shape = 'u8[65536]{0}', space=vmem, size = 0x10000, scoped, tag = 'output window, operand 0']
    %10 = vsyncpa [#allocation4], 0
    %s11 = scalar_lea.sflag [#allocation4], 1
    %12 = vsyncpa %s11, 0
    %13 = vsyncpa [#allocation7], 0
    %14 = vsyncpa [#allocation5], 0
    %s15 = scalar_lea.sflag [#allocation5], 1
    %16 = vsyncpa %s15, 0
    loop: start=0, step=1, limit=4
    $region2: #{tpu_custom_call.1} parent=1 // loop_pre_header
      _
    $region3: #{tpu_custom_call.1} parent=1 // loop_header
      %s18 = sphi 0, %s22
      %p19 = scmp.ge.s32.totalorder %s18, 4
      %s25 = sphi 0, %s37
      %s26 = sphi 0, %s33
      %s27 = sphi 0, %s25
      %s28 = sphi 0, %s26
      %s29 = sphi 0, %s27
      %s30 = sphi 0, %s28
      %s40 = sphi 0, %s42
      %s43 = sphi 0, %s40
      %s44 = sphi 0, %s43
      %s60 = sphi 0, %s44
      %s64 = sphi 0, %s64
      %s66 = sphi 0, %s64
      %s67 = sphi 0, %s66
      %s81 = sphi 0, %s67
      %s85 = sphi 0, %s85
      %s87 = sphi 0, %s85
      %s88 = sphi 0, %s87
      %s102 = sphi 0, %s88
      %s108 = sphi 0, %s110
      %s111 = sphi 0, %s108
      %s112 = sphi 0, %s111
      %s128 = sphi 0, %s112
      %s134 = sphi 0, %s136
      %s137 = sphi 0, %s134
      %s138 = sphi 0, %s137
      %s154 = sphi 0, %s138
      %s162 = sphi 0, %s164
      %s165 = sphi 0, %s162
      %s166 = sphi 0, %s165
      %s182 = sphi 0, %s166
    $region4: #{tpu_custom_call.1} parent=1 // loop_header_branch
      %21 = sbr.rel (%p19) target = $region8
    $region5: #{tpu_custom_call.1} parent=1 // loop_body
      %s23 = ssub.s32 %s18, 1
      %s24 = ssub.s32 %s18, 2
      %s31 = sadd.s32 1, %s26
      %p32 = scmp.ge.s32.totalorder %s31, 1
      %s33 = scalar_select %p32, 0, %s31
      %s34 = sadd.s32 1, %s25
      %s35 = scalar_select %p32, %s34, %s25
      %p36 = scmp.ge.s32.totalorder %s35, 2
      %s37 = scalar_select %p36, 0, %s35
      %s38 = ssub.s32 %s25, %s37
      %p39 = scmp.eq.s32.totalorder %s38, 0
      %s41 = sadd.s32 %s40, 1
      %s42 = scalar_select %p39, %s40, %s41
      %p45 = pneg %p39
      %p46 = scmp.eq.s32.totalorder %s18, 1
      %p47 = por %p45, %p46
      %p48 = scmp.ne.s32.totalorder %s40, %s43
      %p49 = scmp.eq.s32.totalorder %s18, 0
      %p50 = por %p48, %p49
      %p51 = scmp.ne.s32.totalorder %s40, %s43
      %p52 = scmp.eq.s32.totalorder %s23, 1
      %p53 = por %p51, %p52
      %p54 = scmp.ne.s32.totalorder %s43, %s44
      %p55 = scmp.eq.s32.totalorder %s23, 0
      %p56 = por %p54, %p55
      %p57 = scmp.ne.s32.totalorder %s43, %s44
      %p58 = scmp.eq.s32.totalorder %s24, 1
      %p59 = por %p57, %p58
      %p61 = scmp.ne.s32.totalorder %s44, %s60
      %p62 = scmp.eq.s32.totalorder %s24, 0
      %p63 = por %p61, %p62
      %s65 = sadd.s32 %s64, 1
      %p68 = scmp.eq.s32.totalorder %s18, 1
      %p69 = scmp.ne.s32.totalorder %s64, %s66
      %p70 = scmp.eq.s32.totalorder %s18, 0
      %p71 = por %p69, %p70
      %p72 = scmp.ne.s32.totalorder %s64, %s66
      %p73 = scmp.eq.s32.totalorder %s23, 1
      %p74 = por %p72, %p73
      %p75 = scmp.ne.s32.totalorder %s66, %s67
      %p76 = scmp.eq.s32.totalorder %s23, 0
      %p77 = por %p75, %p76
      %p78 = scmp.ne.s32.totalorder %s66, %s67
      %p79 = scmp.eq.s32.totalorder %s24, 1
      %p80 = por %p78, %p79
      %p82 = scmp.ne.s32.totalorder %s67, %s81
      %p83 = scmp.eq.s32.totalorder %s24, 0
      %p84 = por %p82, %p83
      %s86 = sadd.s32 %s85, 1
      %p89 = scmp.eq.s32.totalorder %s18, 1
      %p90 = scmp.ne.s32.totalorder %s85, %s87
      %p91 = scmp.eq.s32.totalorder %s18, 0
      %p92 = por %p90, %p91
      %p93 = scmp.ne.s32.totalorder %s85, %s87
      %p94 = scmp.eq.s32.totalorder %s23, 1
      %p95 = por %p93, %p94
      %p96 = scmp.ne.s32.totalorder %s87, %s88
      %p97 = scmp.eq.s32.totalorder %s23, 0
      %p98 = por %p96, %p97
      %p99 = scmp.ne.s32.totalorder %s87, %s88
      %p100 = scmp.eq.s32.totalorder %s24, 1
      %p101 = por %p99, %p100
      %p103 = scmp.ne.s32.totalorder %s88, %s102
      %p104 = scmp.eq.s32.totalorder %s24, 0
      %p105 = por %p103, %p104
      %s106 = ssub.s32 %s26, %s33
      %p107 = scmp.eq.s32.totalorder %s106, 0
      %s109 = sadd.s32 %s108, 1
      %s110 = scalar_select %p107, %s108, %s109
      %p113 = pneg %p107
      %p114 = scmp.eq.s32.totalorder %s18, 1
      %p115 = por %p113, %p114
      %p116 = scmp.ne.s32.totalorder %s108, %s111
      %p117 = scmp.eq.s32.totalorder %s18, 0
      %p118 = por %p116, %p117
      %p119 = scmp.ne.s32.totalorder %s108, %s111
      %p120 = scmp.eq.s32.totalorder %s23, 1
      %p121 = por %p119, %p120
      %p122 = scmp.ne.s32.totalorder %s111, %s112
      %p123 = scmp.eq.s32.totalorder %s23, 0
      %p124 = por %p122, %p123
      %p125 = scmp.ne.s32.totalorder %s111, %s112
      %p126 = scmp.eq.s32.totalorder %s24, 1
      %p127 = por %p125, %p126
      %p129 = scmp.ne.s32.totalorder %s112, %s128
      %p130 = scmp.eq.s32.totalorder %s24, 0
      %p131 = por %p129, %p130
      %s132 = ssub.s32 %s26, %s33
      %p133 = scmp.eq.s32.totalorder %s132, 0
      %s135 = sadd.s32 %s134, 1
      %s136 = scalar_select %p133, %s134, %s135
      %p139 = pneg %p133
      %p140 = scmp.eq.s32.totalorder %s18, 1
      %p141 = por %p139, %p140
      %p142 = scmp.ne.s32.totalorder %s134, %s137
      %p143 = scmp.eq.s32.totalorder %s18, 0
      %p144 = por %p142, %p143
      %p145 = scmp.ne.s32.totalorder %s134, %s137
      %p146 = scmp.eq.s32.totalorder %s23, 1
      %p147 = por %p145, %p146
      %p148 = scmp.ne.s32.totalorder %s137, %s138
      %p149 = scmp.eq.s32.totalorder %s23, 0
      %p150 = por %p148, %p149
      %p151 = scmp.ne.s32.totalorder %s137, %s138
      %p152 = scmp.eq.s32.totalorder %s24, 1
      %p153 = por %p151, %p152
      %p155 = scmp.ne.s32.totalorder %s138, %s154
      %p156 = scmp.eq.s32.totalorder %s24, 0
      %p157 = por %p155, %p156
      %s158 = ssub.s32 %s25, %s37
      %s159 = ssub.s32 %s26, %s33
      %s160 = sor.u32 %s158, %s159
      %p161 = scmp.eq.s32.totalorder %s160, 0
      %s163 = sadd.s32 %s162, 1
      %s164 = scalar_select %p161, %s162, %s163
      %p167 = pneg %p161
      %p168 = scmp.eq.s32.totalorder %s18, 1
      %p169 = por %p167, %p168
      %p170 = scmp.ne.s32.totalorder %s162, %s165
      %p171 = scmp.eq.s32.totalorder %s18, 0
      %p172 = por %p170, %p171
      %p173 = scmp.ne.s32.totalorder %s162, %s165
      %p174 = scmp.eq.s32.totalorder %s23, 1
      %p175 = por %p173, %p174
      %p176 = scmp.ne.s32.totalorder %s165, %s166
      %p177 = scmp.eq.s32.totalorder %s23, 0
      %p178 = por %p176, %p177
      %p179 = scmp.ne.s32.totalorder %s165, %s166
      %p180 = scmp.eq.s32.totalorder %s24, 1
      %p181 = por %p179, %p180
      %p183 = scmp.ne.s32.totalorder %s166, %s182
      %p184 = scmp.eq.s32.totalorder %s24, 0
      %p185 = por %p183, %p184
      %p186 = scmp.le.s32.totalorder 1, %s18
      %p187 = scmp.lt.s32.totalorder %s18, 3
      %p188 = pnand %p186, %p187
      %p189 = pneg %p188
      // Predicated region
      $region9: #{tpu_custom_call.1} parent=5 // pred_check
        _
      $region10: #{tpu_custom_call.1} parent=5 // pred_check_branch
        %191 = sbr.rel (%p188) target = $region12
      $region11: #{tpu_custom_call.1} parent=5 // pred_region
        %s192 = ssub.s32 %s18, 1
        // Predicated region
        $region13: #{tpu_custom_call.1} parent=11 // pred_check
          %p193 = pneg %p77
        $region14: #{tpu_custom_call.1} parent=11 // pred_check_branch
          %195 = sbr.rel (%p193) target = $region16
        $region15: #{tpu_custom_call.1} parent=11 // pred_region
          _
        $region16: #{tpu_custom_call.1} parent=11 // pred_fallthru
          _
        // Predicated region
        $region17: #{tpu_custom_call.1} parent=11 // pred_check
          %p196 = pneg %p98
        $region18: #{tpu_custom_call.1} parent=11 // pred_check_branch
          %198 = sbr.rel (%p196) target = $region20
        $region19: #{tpu_custom_call.1} parent=11 // pred_region
          _
        $region20: #{tpu_custom_call.1} parent=11 // pred_fallthru
          _
        // Predicated region
        $region21: #{tpu_custom_call.1} parent=11 // pred_check
          %p199 = pneg %p124
        $region22: #{tpu_custom_call.1} parent=11 // pred_check_branch
          %201 = sbr.rel (%p199) target = $region24
        $region23: #{tpu_custom_call.1} parent=11 // pred_region
          %s203 = ssub.s32 1024, 1024
          %204 = vsyncadd [#allocation7], %s203
          %s205 = smul.addr %s28, 64
          %s206 = scalar_lea.hbm %s3, %s205
          %s207 = sshll.u32 [#allocation6], 4
          %s208 = int_to_ptr.vmem [resolvable:$true] %s207
          %213 = dma.hbm_to_vmem [thread:$0]  %s206, 1024, %s208, [#allocation7], 64, 64, 4
        $region24: #{tpu_custom_call.1} parent=11 // pred_fallthru
          _
        // Predicated region
        $region25: #{tpu_custom_call.1} parent=11 // pred_check
          %p214 = pneg %p150
        $region26: #{tpu_custom_call.1} parent=11 // pred_check_branch
          %216 = sbr.rel (%p214) target = $region28
        $region27: #{tpu_custom_call.1} parent=11 // pred_region
          %p217 = scmp.lt.s32.totalorder %s28, 0
          %s218 = scalar_select %p217, %s28, 0
          %s219 = scalar_lea.vmem %s4, %s218
        $region28: #{tpu_custom_call.1} parent=11 // pred_fallthru
          _
      $region12: #{tpu_custom_call.1} parent=5 // pred_fallthru
        _
      %p220 = scmp.lt.s32.totalorder %s18, 2
      // Predicated region
      $region29: #{tpu_custom_call.1} parent=5 // pred_check
        %p221 = pneg %p220
      $region30: #{tpu_custom_call.1} parent=5 // pred_check_branch
        %223 = sbr.rel (%p221) target = $region32
      $region31: #{tpu_custom_call.1} parent=5 // pred_region
        // Predicated region
        $region33: #{tpu_custom_call.1} parent=31 // pred_check
          %p224 = pneg %p50
        $region34: #{tpu_custom_call.1} parent=31 // pred_check_branch
          %226 = sbr.rel (%p224) target = $region36
        $region35: #{tpu_custom_call.1} parent=31 // pred_region
          %s227 = sand.u32 %s40, 1
          %s228 = scalar_lea.sflag [#allocation4], %s227
          %s229 = sand.u32 %s40, 1
          %s230 = smul.addr %s229, 64
          %s231 = scalar_lea.vmem [#allocation3], %s230
          %s232 = smul.u32 8, %s25
          %s234 = ssub.s32 1024, 1024
          %235 = vsyncadd %s228, %s234
          %s236 = smul.addr %s232, 128
          %s237 = scalar_lea.hbm %s0, %s236
          %s238 = sshll.u32 %s231, 4
          %s239 = int_to_ptr.vmem [resolvable:$true] %s238
          %244 = dma.hbm_to_vmem [thread:$0]  %s237, 1024, %s239, %s228, 128, 128, 8
        $region36: #{tpu_custom_call.1} parent=31 // pred_fallthru
          _
      $region32: #{tpu_custom_call.1} parent=5 // pred_fallthru
        _
      %p245 = scmp.le.s32.totalorder 1, %s18
      %p246 = scmp.lt.s32.totalorder %s18, 3
      %p247 = pnand %p245, %p246
      %p248 = pneg %p247
      // Predicated region
      $region37: #{tpu_custom_call.1} parent=5 // pred_check
        _
      $region38: #{tpu_custom_call.1} parent=5 // pred_check_branch
        %250 = sbr.rel (%p247) target = $region40
      $region39: #{tpu_custom_call.1} parent=5 // pred_region
        %s251 = ssub.s32 %s18, 1
        %s252 = sand.u32 %s43, 1
        %s253 = scalar_lea.sflag [#allocation4], %s252
        %s254 = sand.u32 %s43, 1
        %s255 = smul.addr %s254, 64
        %s256 = scalar_lea.vmem [#allocation3], %s255
        // Predicated region
        $region41: #{tpu_custom_call.1} parent=39 // pred_check
          %p257 = pneg %p56
        $region42: #{tpu_custom_call.1} parent=39 // pred_check_branch
          %259 = sbr.rel (%p257) target = $region44
        $region43: #{tpu_custom_call.1} parent=39 // pred_region
          %260 = dma.done %s253, 1024
        $region44: #{tpu_custom_call.1} parent=39 // pred_fallthru
          _
        // Predicated region
        $region45: #{tpu_custom_call.1} parent=39 // pred_check
          %p261 = pneg %p124
        $region46: #{tpu_custom_call.1} parent=39 // pred_check_branch
          %263 = sbr.rel (%p261) target = $region48
        $region47: #{tpu_custom_call.1} parent=39 // pred_region
          %264 = dma.done [#allocation7], 1024
        $region48: #{tpu_custom_call.1} parent=39 // pred_fallthru
          _
        %s265 = sand.u32 %s43, 1
        %s266 = scalar_lea.sflag [#allocation4], %s265
        %s267 = sand.u32 %s43, 1
        %s268 = smul.addr %s267, 64
        %s269 = scalar_lea.vmem [#allocation3], %s268
        %p270 = pneg %p56
        %p271 = pneg %p53
        %p272 = pneg %p77
        %p273 = pneg %p74
        %p274 = pneg %p98
        %p275 = pneg %p95
        %p276 = pneg %p124
        %p277 = pneg %p121
        %p278 = scmp.lt.s32.totalorder %s28, 0
        %s279 = scalar_select %p278, %s28, 0
        %s280 = scalar_lea.vmem %s4, %s279
        %p281 = pneg %p150
        %p282 = pneg %p147
        %p283 = pneg %p178
        %p284 = pneg %p175
        %s285 = sand.u32 %s165, 1
        %s286 = scalar_lea.sflag [#allocation5], %s285
        %s287 = sand.u32 %s165, 1
        %s288 = smul.addr %s287, 64
        %s289 = scalar_lea.vmem [#allocation8], %s288
        %s290 = smul.u32 8, %s27
        %p291 = scmp.lt.s32.totalorder %s28, 0
        %s292 = scalar_select %p291, %s28, 0
        %s293 = scalar_lea.vmem %s4, %s292
        %s294 = smul.u32 8, %s27
        %p296 = scmp.eq.s32.totalorder %s28, 0
        // Predicated region
        $region49: #{tpu_custom_call.1} parent=39 // pred_check
          %p297 = pneg %p296
        $region50: #{tpu_custom_call.1} parent=39 // pred_check_branch
          %299 = sbr.rel (%p297) target = $region52
        $region51: #{tpu_custom_call.1} parent=39 // pred_region
          %v300 = vld [vmem:[%s256] sm:$0xff]
          %v301 = vld [vmem:[%s256 + $0x8] sm:$0xff]
          %v302 = vld [vmem:[%s256 + $0x10] sm:$0xff]
          %v303 = vld [vmem:[%s256 + $0x18] sm:$0xff]
          %v304 = vld [vmem:[%s256 + $0x20] sm:$0xff]
          %v305 = vld [vmem:[%s256 + $0x28] sm:$0xff]
          %v306 = vld [vmem:[%s256 + $0x30] sm:$0xff]
          %v307 = vld [vmem:[%s256 + $0x38] sm:$0xff]
          %308 = vadd.xlane.f32.xlu0 %v300
          %v309 = vpop.xlane.xlu0 %308
          %310 = vadd.xlane.f32.xlu0 %v301
          %v311 = vpop.xlane.xlu0 %310
          %312 = vadd.xlane.f32.xlu0 %v302
          %v313 = vpop.xlane.xlu0 %312
          %314 = vadd.xlane.f32.xlu0 %v303
          %v315 = vpop.xlane.xlu0 %314
          %316 = vadd.xlane.f32.xlu0 %v304
          %v317 = vpop.xlane.xlu0 %316
          %318 = vadd.xlane.f32.xlu0 %v305
          %v319 = vpop.xlane.xlu0 %318
          %320 = vadd.xlane.f32.xlu0 %v306
          %v321 = vpop.xlane.xlu0 %320
          %322 = vadd.xlane.f32.xlu0 %v307
          %v323 = vpop.xlane.xlu0 %322
          %v324 = vrcp.pop 128.0
          %v325 = vmul.f32 %v309, %v324
          %v326 = vmul.f32 %v311, %v324
          %v327 = vmul.f32 %v313, %v324
          %v328 = vmul.f32 %v315, %v324
          %v329 = vmul.f32 %v317, %v324
          %v330 = vmul.f32 %v319, %v324
          %v331 = vmul.f32 %v321, %v324
          %v332 = vmul.f32 %v323, %v324
          %v333 = vsub.f32 %v300, %v325
          %v334 = vsub.f32 %v301, %v326
          %v335 = vsub.f32 %v302, %v327
          %v336 = vsub.f32 %v303, %v328
          %v337 = vsub.f32 %v304, %v329
          %v338 = vsub.f32 %v305, %v330
          %v339 = vsub.f32 %v306, %v331
          %v340 = vsub.f32 %v307, %v332
          %v341 = vmul.f32 %v333, %v333
          %v342 = vmul.f32 %v334, %v334
          %v343 = vmul.f32 %v335, %v335
          %v344 = vmul.f32 %v336, %v336
          %v345 = vmul.f32 %v337, %v337
          %v346 = vmul.f32 %v338, %v338
          %v347 = vmul.f32 %v339, %v339
          %v348 = vmul.f32 %v340, %v340
          %349 = vadd.xlane.f32.xlu0 %v341
          %v350 = vpop.xlane.xlu0 %349
          %351 = vadd.xlane.f32.xlu0 %v342
          %v352 = vpop.xlane.xlu0 %351
          %353 = vadd.xlane.f32.xlu0 %v343
          %v354 = vpop.xlane.xlu0 %353
          %355 = vadd.xlane.f32.xlu0 %v344
          %v356 = vpop.xlane.xlu0 %355
          %357 = vadd.xlane.f32.xlu0 %v345
          %v358 = vpop.xlane.xlu0 %357
          %359 = vadd.xlane.f32.xlu0 %v346
          %v360 = vpop.xlane.xlu0 %359
          %361 = vadd.xlane.f32.xlu0 %v347
          %v362 = vpop.xlane.xlu0 %361
          %363 = vadd.xlane.f32.xlu0 %v348
          %v364 = vpop.xlane.xlu0 %363
          %v365 = vmul.f32 %v350, %v324
          %v366 = vmul.f32 %v352, %v324
          %v367 = vmul.f32 %v354, %v324
          %v368 = vmul.f32 %v356, %v324
          %v369 = vmul.f32 %v358, %v324
          %v370 = vmul.f32 %v360, %v324
          %v371 = vmul.f32 %v362, %v324
          %v372 = vmul.f32 %v364, %v324
          %v373 = vadd.f32 %v365, 1e-05
          %v374 = vadd.f32 %v366, 1e-05
          %v375 = vadd.f32 %v367, 1e-05
          %v376 = vadd.f32 %v368, 1e-05
          %v377 = vadd.f32 %v369, 1e-05
          %v378 = vadd.f32 %v370, 1e-05
          %v379 = vadd.f32 %v371, 1e-05
          %v380 = vadd.f32 %v372, 1e-05
          %v381 = vrsqrt.pop %v373
          %v382 = vrsqrt.pop %v374
          %v383 = vrsqrt.pop %v375
          %v384 = vrsqrt.pop %v376
          %v385 = vrsqrt.pop %v377
          %v386 = vrsqrt.pop %v378
          %v387 = vrsqrt.pop %v379
          %v388 = vrsqrt.pop %v380
          %v389 = vmul.f32 %v333, %v381
          %v390 = vmul.f32 %v334, %v382
          %v391 = vmul.f32 %v335, %v383
          %v392 = vmul.f32 %v336, %v384
          %v393 = vmul.f32 %v337, %v385
          %v394 = vmul.f32 %v338, %v386
          %v395 = vmul.f32 %v339, %v387
          %v396 = vmul.f32 %v340, %v388
          %v397 = vld [vmem:[%s1] sm:$0x1]
          %v399 = vlaneseq
          %v400 = vshrl.u32 %v399, 7
          %v401 = vsub.s32 0, %v400
          %v402 = vrot.slane %v397, %v401
          %v404 = vmul.f32 %v389, %v402
          %v405 = vmul.f32 %v390, %v402
          %v406 = vmul.f32 %v391, %v402
          %v407 = vmul.f32 %v392, %v402
          %v408 = vmul.f32 %v393, %v402
          %v409 = vmul.f32 %v394, %v402
          %v410 = vmul.f32 %v395, %v402
          %v411 = vmul.f32 %v396, %v402
          %v412 = vld [vmem:[%s2] sm:$0x1]
          %v414 = vlaneseq
          %v415 = vshrl.u32 %v414, 7
          %v416 = vsub.s32 0, %v415
          %v417 = vrot.slane %v412, %v416
          %v419 = vadd.f32 %v404, %v417
          %v420 = vadd.f32 %v405, %v417
          %v421 = vadd.f32 %v406, %v417
          %v422 = vadd.f32 %v407, %v417
          %v423 = vadd.f32 %v408, %v417
          %v424 = vadd.f32 %v409, %v417
          %v425 = vadd.f32 %v410, %v417
          %v426 = vadd.f32 %v411, %v417
          %v427 = vpack.c.bf16 %v420, %v419
          %v428 = vpack.c.bf16 %v422, %v421
          %v429 = vpack.c.bf16 %v424, %v423
          %v430 = vpack.c.bf16 %v426, %v425
          %431 = vst [vmem:[#allocation2] sm:$0xff] %v427
          %432 = vst [vmem:[#allocation2 + $0x8] sm:$0xff] %v428
          %433 = vst [vmem:[#allocation2 + $0x10] sm:$0xff] %v429
          %434 = vst [vmem:[#allocation2 + $0x18] sm:$0xff] %v430
        $region52: #{tpu_custom_call.1} parent=39 // pred_fallthru
          _
        %v435 = vld [vmem:[#allocation2] sm:$0xff]
        %v436 = vld [vmem:[#allocation2 + $0x8] sm:$0xff]
        %v437 = vld [vmem:[#allocation2 + $0x10] sm:$0xff]
        %v438 = vld [vmem:[#allocation2 + $0x18] sm:$0xff]
        %v439 = vld [vmem:[#allocation6] sm:$0xf]
        %v440 = vld [vmem:[#allocation6 + $0x4] sm:$0xf]
        %v441 = vld [vmem:[#allocation6 + $0x8] sm:$0xf]
        %v442 = vld [vmem:[#allocation6 + $0xc] sm:$0xf]
        %v443 = vld [vmem:[#allocation6 + $0x10] sm:$0xf]
        %v444 = vld [vmem:[#allocation6 + $0x14] sm:$0xf]
        %v445 = vld [vmem:[#allocation6 + $0x18] sm:$0xf]
        %v446 = vld [vmem:[#allocation6 + $0x1c] sm:$0xf]
        %v447 = vld [vmem:[#allocation6 + $0x20] sm:$0xf]
        %v448 = vld [vmem:[#allocation6 + $0x24] sm:$0xf]
        %v449 = vld [vmem:[#allocation6 + $0x28] sm:$0xf]
        %v450 = vld [vmem:[#allocation6 + $0x2c] sm:$0xf]
        %v451 = vld [vmem:[#allocation6 + $0x30] sm:$0xf]
        %v452 = vld [vmem:[#allocation6 + $0x34] sm:$0xf]
        %v453 = vld [vmem:[#allocation6 + $0x38] sm:$0xf]
        %v454 = vld [vmem:[#allocation6 + $0x3c] sm:$0xf]
        %v455 = vld [vmem:[%s293] sm:$0x1]
        %v457 = vlaneseq
        %v458 = vshrl.u32 %v457, 7
        %v459 = vsub.s32 0, %v458
        %v460 = vrot.slane %v455, %v459
        %v478 = vunpack.c.l.b16 %v439
        %v479 = vunpack.c.l.b16 %v440
        %v480 = vunpack.c.l.b16 %v441
        %v481 = vunpack.c.l.b16 %v442
        %v482 = vunpack.c.l.b16 %v443
        %v483 = vunpack.c.l.b16 %v444
        %v484 = vunpack.c.l.b16 %v445
        %v485 = vunpack.c.l.b16 %v446
        %v486 = vunpack.c.l.b16 %v447
        %v487 = vunpack.c.l.b16 %v448
        %v488 = vunpack.c.l.b16 %v449
        %v489 = vunpack.c.l.b16 %v450
        %v490 = vunpack.c.l.b16 %v451
        %v491 = vunpack.c.l.b16 %v452
        %v492 = vunpack.c.l.b16 %v453
        %v493 = vunpack.c.l.b16 %v454
        %v494 = vpack.c.b16 %v479, %v478
        %v495 = vpack.c.b16 %v481, %v480
        %v496 = vpack.c.b16 %v483, %v482
        %v497 = vpack.c.b16 %v485, %v484
        %v498 = vpack.c.b16 %v487, %v486
        %v499 = vpack.c.b16 %v489, %v488
        %v500 = vpack.c.b16 %v491, %v490
        %v501 = vpack.c.b16 %v493, %v492
        %510 = vmatprep.subr.bf16.mxu0 0
        %511 = vmatpush1.bf16.msra.mxu0 %v494
        %512 = vmatprep.subr.bf16.mxu0 0
        %513 = vmatpush1.bf16.msra.mxu0 %v495
        %514 = vmatprep.subr.bf16.mxu0 0
        %515 = vmatpush1.bf16.msra.mxu0 %v496
        %516 = vmatprep.subr.bf16.mxu0 0
        %517 = vmatpush1.bf16.msra.mxu0 %v497
        %518 = vmatprep.subr.bf16.mxu0 0
        %519 = vmatpush1.bf16.msra.mxu0 %v498
        %520 = vmatprep.subr.bf16.mxu0 0
        %521 = vmatpush1.bf16.msra.mxu0 %v499
        %522 = vmatprep.subr.bf16.mxu0 0
        %523 = vmatpush1.bf16.msra.mxu0 %v500
        %524 = vmatprep.subr.bf16.mxu0 0
        %525 = vmatpush1.bf16.msra.mxu0 %v501
        %526 = vmatprep.subr.bf16.mxu0 0
        %527 = vmatpush1.bf16.msra.mxu0 0
        %528 = vmatprep.subr.bf16.mxu0 0
        %529 = vmatpush1.bf16.msra.mxu0 0
        %530 = vmatprep.subr.bf16.mxu0 0
        %531 = vmatpush1.bf16.msra.mxu0 0
        %532 = vmatprep.subr.bf16.mxu0 0
        %533 = vmatpush1.bf16.msra.mxu0 0
        %534 = vmatprep.subr.bf16.mxu0 0
        %535 = vmatpush1.bf16.msra.mxu0 0
        %536 = vmatprep.subr.bf16.mxu0 0
        %537 = vmatpush1.bf16.msra.mxu0 0
        %538 = vmatprep.subr.bf16.mxu0 0
        %539 = vmatpush1.bf16.msra.mxu0 0
        %540 = vmatprep.subr.bf16.mxu0 0
        %541 = vmatpush1.bf16.msra.mxu0 0
        %542 = vmatprep.mubr.bf16.mxu0 0
        %543 = vmatmul.mubr.bf16.gmra.mrb[0].mxu0 %v435
        %v544 = vpop.f32.mrb[0].mxu0
        %v545 = vadd.f32 %v460, %v544
        %v546 = vpop.f32.mrb[0].mxu0
        %v547 = vpop.f32.mrb[0].mxu0
        %v548 = vadd.f32 %v460, %v547
        %v549 = vpop.f32.mrb[0].mxu0
        %550 = vmatprep.mubr.bf16.mxu0 0
        %551 = vmatmul.mubr.bf16.gmra.mrb[0].mxu0 %v436
        %v552 = vpop.f32.mrb[0].mxu0
        %v553 = vadd.f32 %v460, %v552
        %v554 = vpop.f32.mrb[0].mxu0
        %v555 = vpop.f32.mrb[0].mxu0
        %v556 = vadd.f32 %v460, %v555
        %v557 = vpop.f32.mrb[0].mxu0
        %558 = vmatprep.mubr.bf16.mxu0 0
        %559 = vmatmul.mubr.bf16.gmra.mrb[0].mxu0 %v437
        %v560 = vpop.f32.mrb[0].mxu0
        %v561 = vadd.f32 %v460, %v560
        %v562 = vpop.f32.mrb[0].mxu0
        %v563 = vpop.f32.mrb[0].mxu0
        %v564 = vadd.f32 %v460, %v563
        %v565 = vpop.f32.mrb[0].mxu0
        %566 = vmatprep.mubr.bf16.mxu0 0
        %567 = vmatmul.mubr.bf16.gmra.mrb[0].mxu0 %v438
        %v568 = vpop.f32.mrb[0].mxu0
        %v569 = vadd.f32 %v460, %v568
        %v570 = vpop.f32.mrb[0].mxu0
        %v571 = vpop.f32.mrb[0].mxu0
        %v572 = vadd.f32 %v460, %v571
        %v573 = vpop.f32.mrb[0].mxu0
        %574 = vdwg.mxu0
        %v575 = vld [vmem:[%s256] sm:$0xff]
        %v576 = vld [vmem:[%s256 + $0x8] sm:$0xff]
        %v577 = vld [vmem:[%s256 + $0x10] sm:$0xff]
        %v578 = vld [vmem:[%s256 + $0x18] sm:$0xff]
        %v579 = vld [vmem:[%s256 + $0x20] sm:$0xff]
        %v580 = vld [vmem:[%s256 + $0x28] sm:$0xff]
        %v581 = vld [vmem:[%s256 + $0x30] sm:$0xff]
        %v582 = vld [vmem:[%s256 + $0x38] sm:$0xff]
        %v583 = vadd.f32 %v575, %v545
        %v584 = vadd.f32 %v576, %v548
        %v585 = vadd.f32 %v577, %v553
        %v586 = vadd.f32 %v578, %v556
        %v587 = vadd.f32 %v579, %v561
        %v588 = vadd.f32 %v580, %v564
        %v589 = vadd.f32 %v581, %v569
        %v590 = vadd.f32 %v582, %v572
        %591 = vst [vmem:[%s289] sm:$0xff] %v583
        %592 = vst [vmem:[%s289 + $0x8] sm:$0xff] %v584
        %593 = vst [vmem:[%s289 + $0x10] sm:$0xff] %v585
        %594 = vst [vmem:[%s289 + $0x18] sm:$0xff] %v586
        %595 = vst [vmem:[%s289 + $0x20] sm:$0xff] %v587
        %596 = vst [vmem:[%s289 + $0x28] sm:$0xff] %v588
        %597 = vst [vmem:[%s289 + $0x30] sm:$0xff] %v589
        %598 = vst [vmem:[%s289 + $0x38] sm:$0xff] %v590
        %s599 = sand.u32 %s165, 1
        %s600 = scalar_lea.sflag [#allocation5], %s599
        %s601 = sand.u32 %s165, 1
        %s602 = smul.addr %s601, 64
        %s603 = scalar_lea.vmem [#allocation8], %s602
        // Predicated region
        $region53: #{tpu_custom_call.1} parent=39 // pred_check
          %p604 = pneg %p175
        $region54: #{tpu_custom_call.1} parent=39 // pred_check_branch
          %606 = sbr.rel (%p604) target = $region56
        $region55: #{tpu_custom_call.1} parent=39 // pred_region
          %s607 = smul.u32 8, %s27
          %s609 = ssub.s32 1024, 1024
          %610 = vsyncadd %s600, %s609
          %s611 = sadd.s32 %s28, %s607
          %s612 = smul.addr %s611, 128
          %s613 = scalar_lea.hbm %s5, %s612
          %s614 = sshll.u32 %s603, 4
          %s615 = int_to_ptr.vmem [resolvable:$true] %s614
          %620 = dma.vmem_to_hbm [thread:$0]  %s615, 1024, %s613, %s600, 128, 128, 8
        $region56: #{tpu_custom_call.1} parent=39 // pred_fallthru
          _
      $region40: #{tpu_custom_call.1} parent=5 // pred_fallthru
        _
      %p621 = scmp.le.s32.totalorder 2, %s18
      // Predicated region
      $region57: #{tpu_custom_call.1} parent=5 // pred_check
        %p622 = pneg %p621
      $region58: #{tpu_custom_call.1} parent=5 // pred_check_branch
        %624 = sbr.rel (%p622) target = $region60
      $region59: #{tpu_custom_call.1} parent=5 // pred_region
        %s625 = ssub.s32 %s18, 2
        // Predicated region
        $region61: #{tpu_custom_call.1} parent=59 // pred_check
          %p626 = pneg %p181
        $region62: #{tpu_custom_call.1} parent=59 // pred_check_branch
          %628 = sbr.rel (%p626) target = $region64
        $region63: #{tpu_custom_call.1} parent=59 // pred_region
          %s629 = sand.u32 %s166, 1
          %s630 = scalar_lea.sflag [#allocation5], %s629
          %s631 = sand.u32 %s166, 1
          %s632 = smul.addr %s631, 64
          %s633 = scalar_lea.vmem [#allocation8], %s632
          %634 = dma.done %s630, 1024
        $region64: #{tpu_custom_call.1} parent=59 // pred_fallthru
          _
      $region60: #{tpu_custom_call.1} parent=5 // pred_fallthru
        _
    $region6: #{tpu_custom_call.1} parent=1 // loop_footer
      %s22 = sadd.s32 1, %s18
    $region7: #{tpu_custom_call.1} parent=1 // loop_footer_branch
      %17 = sbr.rel target = $region3
    $region8: #{tpu_custom_call.1} parent=1 // loop_exit
      _
    %635 = vsyncpa [#allocation4], 1
    %s636 = scalar_lea.sflag [#allocation4], 1
    %637 = vsyncpa %s636, 1
    %638 = vsyncpa [#allocation7], 1
    %639 = vsyncpa [#allocation5], 1
    %s640 = scalar_lea.sflag [#allocation5], 1
    %641 = vsyncpa %s640, 1

</llo_original>
